<compile_context>
chip_gen: v7x
topology: tpu7x:2x2x1
jax: 0.10.0
libtpu: 0.0.40
codegen_flags: <defaults>
</compile_context>

<pallas_src>
import math
import jax
import jax.numpy as jnp
from jax import lax
from jax.experimental import pallas as pl
from jax.experimental.pallas import tpu as pltpu

MINIMUM_VALUE = -1e9  # stand-in for C.MINIMUM_VALUE

_VMEM_BUDGET = 24 * 1024 * 1024   # target working set (double-buffered) per step
_VMEM_LIMIT_FLOOR = 32 * 1024 * 1024
_VMEM_LIMIT_CAP = 48 * 1024 * 1024  # stays under v7x's 64 MiB physical VMEM


def _est_step_bytes(bt, tq, Lk, D, Dv, in_b, mask_b, out_b, attn_b):
    """Rough double-buffered VMEM footprint of one grid step (+ f32 score temps)."""
    per = bt * (tq * D * in_b          # q tile
                + Lk * D * in_b        # k (resident per batch)
                + Lk * Dv * in_b       # v (resident per batch)
                + tq * Lk * mask_b     # mask tile
                + tq * Dv * out_b      # out tile
                + tq * Lk * attn_b)    # attn tile
    return 2 * per + 4 * bt * tq * Lk * 4


def _choose_tiles(B, Lq, Lk, D, Dv, in_b, mask_b, out_b, attn_b,
                  budget=_VMEM_BUDGET):
    # TQ: largest multiple-of-8 divisor of Lq up to 512, else the full Lq
    # (block_shape must be a multiple of 8 on the sublane axis or the full dim).
    tq = Lq
    for cand in (512, 256, 128, 64, 32, 16, 8):
        if cand <= Lq and Lq % cand == 0:
            tq = cand
            break
    while _est_step_bytes(1, tq, Lk, D, Dv, in_b, mask_b, out_b, attn_b) > budget \
            and tq > 8 and tq % 16 == 0:
        tq //= 2
    # BT: largest divisor of B whose working set still fits the budget
    # (amortizes per-step overhead when sequences are tiny).
    bt = 1
    for cand in range(B, 0, -1):
        if B % cand == 0 and \
                _est_step_bytes(cand, tq, Lk, D, Dv, in_b, mask_b, out_b, attn_b) <= budget:
            bt = cand
            break
    est = _est_step_bytes(bt, tq, Lk, D, Dv, in_b, mask_b, out_b, attn_b)
    return bt, tq, est


def _sdpa_kernel(q_ref, k_ref, v_ref, mask_ref, out_ref, attn_ref, *, inv_temperature):
    # Blocks: q (BT, TQ, D), k (BT, Lk, D), v (BT, Lk, Dv), mask (BT, TQ, Lk)
    q = q_ref[...] * inv_temperature          # fold 1/T into q (Lq*D mults, stays in q dtype)
    k = k_ref[...]
    v = v_ref[...]
    m = mask_ref[...]

    # scores = q @ k^T (per batch element): contract on D for both operands,
    # batch on axis 0 -> MXU consumes k directly, no XLU transpose.
    scores = lax.dot_general(
        q, k,
        dimension_numbers=(((2,), (2,)), ((0,), (0,))),
        preferred_element_type=jnp.float32)   # (BT, TQ, Lk), f32 accumulation

    keep = m if m.dtype == jnp.bool_ else (m > 0)
    scores = jnp.where(keep, scores, jnp.float32(MINIMUM_VALUE))

    # numerically stable softmax over the last axis
    scores = scores - jnp.max(scores, axis=-1, keepdims=True)
    p = jnp.exp(scores)
    denom = jnp.sum(p, axis=-1, keepdims=True)
    p = p * pl.reciprocal(denom, approx=True)

    # dropout (eval mode) == identity

    attn_ref[...] = p.astype(attn_ref.dtype)

    # output = p @ v (per batch element); keep MXU inputs in v.dtype (bf16 path if bf16)
    out = lax.dot_general(
        p.astype(v.dtype), v,
        dimension_numbers=(((2,), (1,)), ((0,), (0,))),
        preferred_element_type=jnp.float32)   # (BT, TQ, Dv)
    out_ref[...] = out.astype(out_ref.dtype)


def scaled_dot_product_attention(q, k, v, mask, temperature):
    B, Lq, D = q.shape
    _, Lk, Dv = v.shape
    assert k.shape == (B, Lk, D)
    assert mask.shape == (B, Lq, Lk)

    out_dtype = q.dtype
    attn_dtype = q.dtype   # torch: softmax/bmm preserve input dtype

    in_b = jnp.dtype(q.dtype).itemsize
    mask_b = jnp.dtype(mask.dtype).itemsize
    out_b = jnp.dtype(out_dtype).itemsize
    attn_b = jnp.dtype(attn_dtype).itemsize

    BT, TQ, est_bytes = _choose_tiles(B, Lq, Lk, D, Dv, in_b, mask_b, out_b, attn_b)
    grid = (B // BT, Lq // TQ)

    vmem_limit = int(min(max(2 * est_bytes, _VMEM_LIMIT_FLOOR), _VMEM_LIMIT_CAP))

    kernel = lambda *refs: _sdpa_kernel(*refs, inv_temperature=1.0 / float(temperature))

    out, attn = pl.pallas_call(
        kernel,
        out_shape=(
            jax.ShapeDtypeStruct((B, Lq, Dv), out_dtype),
            jax.ShapeDtypeStruct((B, Lq, Lk), attn_dtype),
        ),
        grid_spec=pltpu.PrefetchScalarGridSpec(
            num_scalar_prefetch=0,
            grid=grid,
            in_specs=[
                pl.BlockSpec((BT, TQ, D), lambda b, i: (b, i, 0)),   # q: tiled over Lq
                pl.BlockSpec((BT, Lk, D), lambda b, i: (b, 0, 0)),   # k: resident per batch
                pl.BlockSpec((BT, Lk, Dv), lambda b, i: (b, 0, 0)),  # v: resident per batch
                pl.BlockSpec((BT, TQ, Lk), lambda b, i: (b, i, 0)),  # mask: tiled over Lq
            ],
            out_specs=[
                pl.BlockSpec((BT, TQ, Dv), lambda b, i: (b, i, 0)),
                pl.BlockSpec((BT, TQ, Lk), lambda b, i: (b, i, 0)),
            ],
        ),
        compiler_params=pltpu.CompilerParams(
            dimension_semantics=("parallel", "parallel"),
            vmem_limit_bytes=vmem_limit,
        ),
    )(q, k, v, mask)
    return out, attn


def _reference(q, k, v, mask, temperature):
    attn = jnp.einsum("bqd,bkd->bqk", q, k) / temperature
    keep = mask if mask.dtype == jnp.bool_ else (mask > 0)
    attn = jnp.where(keep, attn, MINIMUM_VALUE)
    attn = jax.nn.softmax(attn, axis=-1)
    out = jnp.einsum("bqk,bkd->bqd", attn, v)
    return out, attn


if __name__ == "__main__":
    B, Lq, Lk, D, Dv = 2, 8, 8, 32, 32
    temperature = math.sqrt(D)

    key = jax.random.PRNGKey(0)
    kq, kk, kv, km = jax.random.split(key, 4)
    q = jax.random.normal(kq, (B, Lq, D), dtype=jnp.float32)
    k = jax.random.normal(kk, (B, Lk, D), dtype=jnp.float32)
    v = jax.random.normal(kv, (B, Lk, Dv), dtype=jnp.float32)
    # boolean mask (mostly True) -- 1 byte/elem instead of 4, semantics: >0 == keep
    mask = jax.random.uniform(km, (B, Lq, Lk)) > 0.2

    out, attn = scaled_dot_product_attention(q, k, v, mask, temperature)
    out = jax.block_until_ready(out)
    attn = jax.block_until_ready(attn)

    out_ref, attn_ref = _reference(q, k, v, mask, temperature)
    # tolerances allow for the approximate (EUP) reciprocal in the softmax denominator
    assert jnp.allclose(attn, attn_ref, atol=2e-3, rtol=2e-3)
    assert jnp.allclose(out, out_ref, atol=5e-3, rtol=5e-3)

    print("KERNEL_OK")
</pallas_src>

<mosaic_0001>
module attributes {stable_mosaic.version = 11 : i64} {
  func.func @_lambda_(%arg0: i32, %arg1: i32, %arg2: memref<2x8x32xf32, #tpu.memory_space<vmem>>, %arg3: memref<2x8x32xf32, #tpu.memory_space<vmem>>, %arg4: memref<2x8x32xf32, #tpu.memory_space<vmem>>, %arg5: memref<2x8x8xi32, #tpu.memory_space<vmem>>, %arg6: memref<2x8x32xf32, #tpu.memory_space<vmem>>, %arg7: memref<2x8x8xf32, #tpu.memory_space<vmem>>) attributes {dimension_semantics = [#tpu.dimension_semantics<parallel>, #tpu.dimension_semantics<parallel>], iteration_bounds = array<i64: 1, 1>, scalar_prefetch = 0 : i64, scratch_operands = 0 : i64, tpu.core_type = #tpu.core_type<tc>, window_params = [{transform_indices = @transform_0, window_bounds = array<i64: 2, 8, 32>}, {transform_indices = @transform_1, window_bounds = array<i64: 2, 8, 32>}, {transform_indices = @transform_2, window_bounds = array<i64: 2, 8, 32>}, {transform_indices = @transform_3, window_bounds = array<i64: 2, 8, 8>}, {transform_indices = @transform_4, window_bounds = array<i64: 2, 8, 32>}, {transform_indices = @transform_5, window_bounds = array<i64: 2, 8, 8>}]} {
    %c0 = arith.constant 0 : index
    %c0_0 = arith.constant 0 : index
    %c0_1 = arith.constant 0 : index
    %0 = vector.load %arg2[%c0, %c0_0, %c0_1] : memref<2x8x32xf32, #tpu.memory_space<vmem>>, vector<2x8x32xf32>
    %cst = arith.constant 0.176776692 : f32
    %1 = vector.broadcast %cst : f32 to vector<2x8x32xf32>
    %2 = arith.mulf %0, %1 : vector<2x8x32xf32>
    %c0_2 = arith.constant 0 : index
    %c0_3 = arith.constant 0 : index
    %c0_4 = arith.constant 0 : index
    %3 = vector.load %arg3[%c0_2, %c0_3, %c0_4] : memref<2x8x32xf32, #tpu.memory_space<vmem>>, vector<2x8x32xf32>
    %c0_5 = arith.constant 0 : index
    %c0_6 = arith.constant 0 : index
    %c0_7 = arith.constant 0 : index
    %4 = vector.load %arg4[%c0_5, %c0_6, %c0_7] : memref<2x8x32xf32, #tpu.memory_space<vmem>>, vector<2x8x32xf32>
    %c0_8 = arith.constant 0 : index
    %c0_9 = arith.constant 0 : index
    %c0_10 = arith.constant 0 : index
    %5 = vector.load %arg5[%c0_8, %c0_9, %c0_10] : memref<2x8x8xi32, #tpu.memory_space<vmem>>, vector<2x8x8xi32>
    %cst_11 = arith.constant dense<0> : vector<2x8x8xi32>
    %6 = arith.cmpi ne, %5, %cst_11 : vector<2x8x8xi32>
    %cst_12 = arith.constant dense<0.000000e+00> : vector<2x8x8xf32>
    %7 = tpu.matmul %2, %3, %cst_12 {dimension_numbers = #tpu.dot_dimension_numbers<[2], [2], [1], [1], [0, 0, 0, 1, 1, 1], [0], [0]>} : vector<2x8x32xf32>, vector<2x8x32xf32>, vector<2x8x8xf32> -> vector<2x8x8xf32>
    %cst_13 = arith.constant -1.000000e+09 : f32
    %8 = vector.broadcast %cst_13 : f32 to vector<2x8x8xf32>
    %9 = arith.select %6, %7, %8 : vector<2x8x8xi1>, vector<2x8x8xf32>
    %cst_14 = arith.constant dense<0xFF800000> : vector<2x8xf32>
    %10 = vector.multi_reduction <maximumf>, %9, %cst_14 [2] : vector<2x8x8xf32> to vector<2x8xf32>
    %11 = vector.shape_cast %10 : vector<2x8xf32> to vector<2x8x1xf32>
    %12 = vector.broadcast %11 : vector<2x8x1xf32> to vector<2x8x8xf32>
    %13 = arith.subf %9, %12 : vector<2x8x8xf32>
    %14 = math.exp %13 : vector<2x8x8xf32>
    %cst_15 = arith.constant dense<0.000000e+00> : vector<2x8xf32>
    %15 = vector.multi_reduction <add>, %14, %cst_15 [2] : vector<2x8x8xf32> to vector<2x8xf32>
    %16 = vector.shape_cast %15 : vector<2x8xf32> to vector<2x8x1xf32>
    %17 = tpu.reciprocal %16 {approx = true} : vector<2x8x1xf32> -> vector<2x8x1xf32>
    %18 = vector.broadcast %17 : vector<2x8x1xf32> to vector<2x8x8xf32>
    %19 = arith.mulf %14, %18 : vector<2x8x8xf32>
    %c0_16 = arith.constant 0 : index
    %c0_17 = arith.constant 0 : index
    %c0_18 = arith.constant 0 : index
    %20 = vector.load %arg7[%c0_16, %c0_17, %c0_18] : memref<2x8x8xf32, #tpu.memory_space<vmem>>, vector<2x8x8xf32>
    tpu.vector_store %arg7[%c0_16, %c0_17, %c0_18], %19 {strides = array<i32>} : memref<2x8x8xf32, #tpu.memory_space<vmem>>, vector<2x8x8xf32>,
    %cst_19 = arith.constant dense<0.000000e+00> : vector<2x8x32xf32>
    %21 = tpu.matmul %19, %4, %cst_19 {dimension_numbers = #tpu.dot_dimension_numbers<[2], [1], [1], [2], [0, 0, 0, 1, 1, 2], [0], [0]>} : vector<2x8x8xf32>, vector<2x8x32xf32>, vector<2x8x32xf32> -> vector<2x8x32xf32>
    %c0_20 = arith.constant 0 : index
    %c0_21 = arith.constant 0 : index
    %c0_22 = arith.constant 0 : index
    %22 = vector.load %arg6[%c0_20, %c0_21, %c0_22] : memref<2x8x32xf32, #tpu.memory_space<vmem>>, vector<2x8x32xf32>
    tpu.vector_store %arg6[%c0_20, %c0_21, %c0_22], %21 {strides = array<i32>} : memref<2x8x32xf32, #tpu.memory_space<vmem>>, vector<2x8x32xf32>,
    return
  }
  func.func @transform_0(%arg0: i32, %arg1: i32) -> (i32, i32, i32) {
    %c0_i32 = arith.constant 0 : i32
    %c0_i32_0 = arith.constant 0 : i32
    return %arg0, %arg1, %c0_i32 : i32, i32, i32
  }
  func.func @transform_1(%arg0: i32, %arg1: i32) -> (i32, i32, i32) {
    %c0_i32 = arith.constant 0 : i32
    %c0_i32_0 = arith.constant 0 : i32
    %c0_i32_1 = arith.constant 0 : i32
    return %arg0, %c0_i32, %c0_i32_0 : i32, i32, i32
  }
  func.func @transform_2(%arg0: i32, %arg1: i32) -> (i32, i32, i32) {
    %c0_i32 = arith.constant 0 : i32
    %c0_i32_0 = arith.constant 0 : i32
    %c0_i32_1 = arith.constant 0 : i32
    return %arg0, %c0_i32, %c0_i32_0 : i32, i32, i32
  }
  func.func @transform_3(%arg0: i32, %arg1: i32) -> (i32, i32, i32) {
    %c0_i32 = arith.constant 0 : i32
    %c0_i32_0 = arith.constant 0 : i32
    return %arg0, %arg1, %c0_i32 : i32, i32, i32
  }
  func.func @transform_4(%arg0: i32, %arg1: i32) -> (i32, i32, i32) {
    %c0_i32 = arith.constant 0 : i32
    %c0_i32_0 = arith.constant 0 : i32
    return %arg0, %arg1, %c0_i32 : i32, i32, i32
  }
  func.func @transform_5(%arg0: i32, %arg1: i32) -> (i32, i32, i32) {
    %c0_i32 = arith.constant 0 : i32
    %c0_i32_0 = arith.constant 0 : i32
    return %arg0, %arg1, %c0_i32 : i32, i32, i32
  }
}

</mosaic_0001>

<llo_original>
// kernel: tpu_custom_call.1
$region0: #{tpu_custom_call.1}
  #allocation0 [shape = 'u32[]', space=smem, size = 0x4, offset = 0x4, fixed_abs, tag = 'smem constant byte address 0x4 - core index']
  #allocation1 [shape = 'u32[144,128]{1,0:T(1,128)}', space=vmem, size = 0x12000, scoped, tag = 'internal scratch']
  %s0 = inlined_call_operand.vmem [shape: f32[2,8,32], index: 0, kind: input, shape index: {}]
  %s1 = inlined_call_operand.hbm [shape: f32[2,8,32], index: 1, kind: input, shape index: {}]
  %s2 = inlined_call_operand.hbm [shape: f32[2,8,32], index: 2, kind: input, shape index: {}]
  %s3 = inlined_call_operand.vmem [shape: s32[2,8,8], index: 3, kind: input, shape index: {}]
  %s4 = inlined_call_operand.hbm [shape: f32[2,8,32], index: 4, kind: output, shape index: {0}]
  %s5 = inlined_call_operand.hbm [shape: f32[2,8,8], index: 5, kind: output, shape index: {1}]
  %6 = xla_tuple %s4, %s5
  %s7 = sld [smem:[#allocation0]]
  $region42: #{tpu_custom_call.1} parent=0
    _
  %s9 = ssub.s32 1, %s7
  %s10 = scalar_select 0, %s9, %s7
  $region1: #{tpu_custom_call.1} parent=0
    #allocation2 [shape = 'u8[8192]{0}', space=vmem, size = 0x2000, scoped, tag = 'input window, operand 1, single buffered']
    #allocation3 [shape = 's32[1]{0}', space=sflag, size = 0x4, scoped, tag = 'scoped memory for tpu_custom_call.1']
    #allocation4 [shape = 's32[1]{0}', space=sflag, size = 0x4, scoped, tag = 'scoped memory for tpu_custom_call.1']
    #allocation5 [shape = 'u8[8192]{0}', space=vmem, size = 0x2000, scoped, tag = 'input window, operand 2, single buffered']
    #allocation6 [shape = 's32[1]{0}', space=sflag, size = 0x4, scoped, tag = 'scoped memory for tpu_custom_call.1']
    #allocation7 [shape = 'u8[8192]{0}', space=vmem, size = 0x2000, scoped, tag = 'output window, operand 0, single buffered']
    #allocation8 [shape = 'u8[8192]{0}', space=vmem, size = 0x2000, scoped, tag = 'output window, operand 1, single buffered']
    #allocation9 [shape = 's32[1]{0}', space=sflag, size = 0x4, scoped, tag = 'scoped memory for tpu_custom_call.1']
    %11 = vsyncpa [#allocation3], 0
    %12 = vsyncpa [#allocation6], 0
    %13 = vsyncpa [#allocation4], 0
    %14 = vsyncpa [#allocation9], 0
    // Predicated region
    $region2: #{tpu_custom_call.1} parent=1 // pred_check
      _
    $region3: #{tpu_custom_call.1} parent=1 // pred_check_branch
      %16 = sbr.rel (0) target = $region5
    $region4: #{tpu_custom_call.1} parent=1 // pred_region
      _
    $region5: #{tpu_custom_call.1} parent=1 // pred_fallthru
      _
    // Predicated region
    $region6: #{tpu_custom_call.1} parent=1 // pred_check
      _
    $region7: #{tpu_custom_call.1} parent=1 // pred_check_branch
      %18 = sbr.rel (0) target = $region9
    $region8: #{tpu_custom_call.1} parent=1 // pred_region
      %s20 = ssub.s32 256, 256
      %21 = vsyncadd [#allocation3], %s20
      %s22 = sshll.u32 [#allocation2], 4
      %s23 = int_to_ptr.vmem [resolvable:$true] %s22
      %28 = dma.hbm_to_vmem [thread:$0]  %s1, 256, %s23, [#allocation3], 128, 128, 8
    $region9: #{tpu_custom_call.1} parent=1 // pred_fallthru
      _
    // Predicated region
    $region10: #{tpu_custom_call.1} parent=1 // pred_check
      _
    $region11: #{tpu_custom_call.1} parent=1 // pred_check_branch
      %30 = sbr.rel (0) target = $region13
    $region12: #{tpu_custom_call.1} parent=1 // pred_region
      %s32 = ssub.s32 256, 256
      %33 = vsyncadd [#allocation6], %s32
      %s34 = sshll.u32 [#allocation5], 4
      %s35 = int_to_ptr.vmem [resolvable:$true] %s34
      %40 = dma.hbm_to_vmem [thread:$0]  %s2, 256, %s35, [#allocation6], 128, 128, 8
    $region13: #{tpu_custom_call.1} parent=1 // pred_fallthru
      _
    // Predicated region
    $region14: #{tpu_custom_call.1} parent=1 // pred_check
      _
    $region15: #{tpu_custom_call.1} parent=1 // pred_check_branch
      %42 = sbr.rel (0) target = $region17
    $region16: #{tpu_custom_call.1} parent=1 // pred_region
      _
    $region17: #{tpu_custom_call.1} parent=1 // pred_fallthru
      _
    // Predicated region
    $region18: #{tpu_custom_call.1} parent=1 // pred_check
      _
    $region19: #{tpu_custom_call.1} parent=1 // pred_check_branch
      %44 = sbr.rel (0) target = $region21
    $region20: #{tpu_custom_call.1} parent=1 // pred_region
      %45 = dma.done [#allocation3], 256
    $region21: #{tpu_custom_call.1} parent=1 // pred_fallthru
      _
    // Predicated region
    $region22: #{tpu_custom_call.1} parent=1 // pred_check
      _
    $region23: #{tpu_custom_call.1} parent=1 // pred_check_branch
      %47 = sbr.rel (0) target = $region25
    $region24: #{tpu_custom_call.1} parent=1 // pred_region
      %48 = dma.done [#allocation6], 256
    $region25: #{tpu_custom_call.1} parent=1 // pred_fallthru
      _
    %v49 = vld [vmem:[%s0] sm:$0xff]
    %v50 = vld [vmem:[%s0 + $0x8] sm:$0xff]
    %v51 = vmul.f32 %v49, 0.17677669
    %v52 = vmul.f32 %v50, 0.17677669
    %v53 = vld [vmem:[#allocation2] sm:$0xff]
    %v54 = vld [vmem:[#allocation2 + $0x8] sm:$0xff]
    %v55 = vld [vmem:[#allocation5] sm:$0xff]
    %v56 = vld [vmem:[#allocation5 + $0x8] sm:$0xff]
    %v57 = vld [vmem:[%s3] sm:$0xff]
    %v58 = vld [vmem:[%s3 + $0x8] sm:$0xff]
    %vm59 = vcmp.ne.s32.totalorder %v57, 0
    %vm60 = vcmp.ne.s32.totalorder %v58, 0
    %vm61 = vcmask 261120
    %v63 = vsel %vm61, %v51, 0
    %v66 = vsel %vm61, %v53, 0
    %68 = vmatprep.subr.mxu0 0.0
    %69 = vmatpush1.xpose.msra.mxu0 %v66
    %70 = vmatprep.subr.mxu0 0.0
    %71 = vmatpush1.xpose.msra.mxu0 0.0
    %72 = vmatprep.subr.mxu0 0.0
    %73 = vmatpush1.xpose.msra.mxu0 0.0
    %74 = vmatprep.subr.mxu0 0.0
    %75 = vmatpush1.xpose.msra.mxu0 0.0
    %76 = vmatprep.subr.mxu0 0.0
    %77 = vmatpush1.xpose.msra.mxu0 0.0
    %78 = vmatprep.subr.mxu0 0.0
    %79 = vmatpush1.xpose.msra.mxu0 0.0
    %80 = vmatprep.subr.mxu0 0.0
    %81 = vmatpush1.xpose.msra.mxu0 0.0
    %82 = vmatprep.subr.mxu0 0.0
    %83 = vmatpush1.xpose.msra.mxu0 0.0
    %84 = vmatprep.subr.mxu0 0.0
    %85 = vmatpush1.xpose.msra.mxu0 0.0
    %86 = vmatprep.subr.mxu0 0.0
    %87 = vmatpush1.xpose.msra.mxu0 0.0
    %88 = vmatprep.subr.mxu0 0.0
    %89 = vmatpush1.xpose.msra.mxu0 0.0
    %90 = vmatprep.subr.mxu0 0.0
    %91 = vmatpush1.xpose.msra.mxu0 0.0
    %92 = vmatprep.subr.mxu0 0.0
    %93 = vmatpush1.xpose.msra.mxu0 0.0
    %94 = vmatprep.subr.mxu0 0.0
    %95 = vmatpush1.xpose.msra.mxu0 0.0
    %96 = vmatprep.subr.mxu0 0.0
    %97 = vmatpush1.xpose.msra.mxu0 0.0
    %98 = vmatprep.subr.mxu0 0.0
    %99 = vmatpush1.xpose.msra.mxu0 0.0
    %100 = vmatprep.subr.mxu0 0.0
    %101 = vmatpush1.xpose.msra.mxu0 0.0
    %102 = vmatprep.subr.mxu0 0.0
    %103 = vmatpush1.xpose.msra.mxu0 0.0
    %104 = vmatprep.subr.mxu0 0.0
    %105 = vmatpush1.xpose.msra.mxu0 0.0
    %106 = vmatprep.subr.mxu0 0.0
    %107 = vmatpush1.xpose.msra.mxu0 0.0
    %108 = vmatprep.subr.mxu0 0.0
    %109 = vmatpush1.xpose.msra.mxu0 0.0
    %110 = vmatprep.subr.mxu0 0.0
    %111 = vmatpush1.xpose.msra.mxu0 0.0
    %112 = vmatprep.subr.mxu0 0.0
    %113 = vmatpush1.xpose.msra.mxu0 0.0
    %114 = vmatprep.subr.mxu0 0.0
    %115 = vmatpush1.xpose.msra.mxu0 0.0
    %116 = vmatprep.subr.mxu0 0.0
    %117 = vmatpush1.xpose.msra.mxu0 0.0
    %118 = vmatprep.subr.mxu0 0.0
    %119 = vmatpush1.xpose.msra.mxu0 0.0
    %120 = vmatprep.subr.mxu0 0.0
    %121 = vmatpush1.xpose.msra.mxu0 0.0
    %122 = vmatprep.subr.mxu0 0.0
    %123 = vmatpush1.xpose.msra.mxu0 0.0
    %124 = vmatprep.subr.mxu0 0.0
    %125 = vmatpush1.xpose.msra.mxu0 0.0
    %126 = vmatprep.subr.mxu0 0.0
    %127 = vmatpush1.xpose.msra.mxu0 0.0
    %128 = vmatprep.subr.mxu0 0.0
    %129 = vmatpush1.xpose.msra.mxu0 0.0
    %130 = vmatprep.subr.mxu0 0.0
    %131 = vmatpush1.xpose.msra.mxu0 0.0
    %132 = vmatprep.mubr.f32.mxu0 0.0
    %133 = vmatmul.mubr.f32.gmra.mrb[0].mxu0 %v63
    %v134 = vpop.f32.mrb[0].mxu0
    %v135 = vadd.f32 0.0, %v134
    %v136 = vpop.f32.mrb[0].mxu0
    %137 = vdwg.mxu0
    %v139 = vsel %vm61, %v52, 0
    %v142 = vsel %vm61, %v54, 0
    %144 = vmatprep.subr.mxu0 0.0
    %145 = vmatpush1.xpose.msra.mxu0 %v142
    %146 = vmatprep.subr.mxu0 0.0
    %147 = vmatpush1.xpose.msra.mxu0 0.0
    %148 = vmatprep.subr.mxu0 0.0
    %149 = vmatpush1.xpose.msra.mxu0 0.0
    %150 = vmatprep.subr.mxu0 0.0
    %151 = vmatpush1.xpose.msra.mxu0 0.0
    %152 = vmatprep.subr.mxu0 0.0
    %153 = vmatpush1.xpose.msra.mxu0 0.0
    %154 = vmatprep.subr.mxu0 0.0
    %155 = vmatpush1.xpose.msra.mxu0 0.0
    %156 = vmatprep.subr.mxu0 0.0
    %157 = vmatpush1.xpose.msra.mxu0 0.0
    %158 = vmatprep.subr.mxu0 0.0
    %159 = vmatpush1.xpose.msra.mxu0 0.0
    %160 = vmatprep.subr.mxu0 0.0
    %161 = vmatpush1.xpose.msra.mxu0 0.0
    %162 = vmatprep.subr.mxu0 0.0
    %163 = vmatpush1.xpose.msra.mxu0 0.0
    %164 = vmatprep.subr.mxu0 0.0
    %165 = vmatpush1.xpose.msra.mxu0 0.0
    %166 = vmatprep.subr.mxu0 0.0
    %167 = vmatpush1.xpose.msra.mxu0 0.0
    %168 = vmatprep.subr.mxu0 0.0
    %169 = vmatpush1.xpose.msra.mxu0 0.0
    %170 = vmatprep.subr.mxu0 0.0
    %171 = vmatpush1.xpose.msra.mxu0 0.0
    %172 = vmatprep.subr.mxu0 0.0
    %173 = vmatpush1.xpose.msra.mxu0 0.0
    %174 = vmatprep.subr.mxu0 0.0
    %175 = vmatpush1.xpose.msra.mxu0 0.0
    %176 = vmatprep.subr.mxu0 0.0
    %177 = vmatpush1.xpose.msra.mxu0 0.0
    %178 = vmatprep.subr.mxu0 0.0
    %179 = vmatpush1.xpose.msra.mxu0 0.0
    %180 = vmatprep.subr.mxu0 0.0
    %181 = vmatpush1.xpose.msra.mxu0 0.0
    %182 = vmatprep.subr.mxu0 0.0
    %183 = vmatpush1.xpose.msra.mxu0 0.0
    %184 = vmatprep.subr.mxu0 0.0
    %185 = vmatpush1.xpose.msra.mxu0 0.0
    %186 = vmatprep.subr.mxu0 0.0
    %187 = vmatpush1.xpose.msra.mxu0 0.0
    %188 = vmatprep.subr.mxu0 0.0
    %189 = vmatpush1.xpose.msra.mxu0 0.0
    %190 = vmatprep.subr.mxu0 0.0
    %191 = vmatpush1.xpose.msra.mxu0 0.0
    %192 = vmatprep.subr.mxu0 0.0
    %193 = vmatpush1.xpose.msra.mxu0 0.0
    %194 = vmatprep.subr.mxu0 0.0
    %195 = vmatpush1.xpose.msra.mxu0 0.0
    %196 = vmatprep.subr.mxu0 0.0
    %197 = vmatpush1.xpose.msra.mxu0 0.0
    %198 = vmatprep.subr.mxu0 0.0
    %199 = vmatpush1.xpose.msra.mxu0 0.0
    %200 = vmatprep.subr.mxu0 0.0
    %201 = vmatpush1.xpose.msra.mxu0 0.0
    %202 = vmatprep.subr.mxu0 0.0
    %203 = vmatpush1.xpose.msra.mxu0 0.0
    %204 = vmatprep.subr.mxu0 0.0
    %205 = vmatpush1.xpose.msra.mxu0 0.0
    %206 = vmatprep.subr.mxu0 0.0
    %207 = vmatpush1.xpose.msra.mxu0 0.0
    %208 = vmatprep.mubr.f32.mxu0 0.0
    %209 = vmatmul.mubr.f32.gmra.mrb[0].mxu0 %v139
    %v210 = vpop.f32.mrb[0].mxu0
    %v211 = vadd.f32 0.0, %v210
    %v212 = vpop.f32.mrb[0].mxu0
    %213 = vdwg.mxu0
    %v214 = vsel %vm59, %v135, -1e+09
    %v215 = vsel %vm60, %v211, -1e+09
    %vm216 = vcmask 64512
    %v217 = vsel %vm216, %v214, -inf
    %218 = vmax.xlane.f32.xlu0 %v217
    %v219 = vpop.xlane.xlu0 %218
    %v220 = vsel %vm216, %v215, -inf
    %221 = vmax.xlane.f32.xlu0 %v220
    %v222 = vpop.xlane.xlu0 %221
    %v223 = vsub.f32 %v214, %v219
    %v224 = vsub.f32 %v215, %v222
    %v225 = vmul.f32 %v223, 1.442695
    %v226 = vpow.pop %v225
    %v227 = vmul.f32 %v224, 1.442695
    %v228 = vpow.pop %v227
    %v229 = vsel %vm216, %v226, 0.0
    %230 = vadd.xlane.f32.xlu0 %v229
    %v231 = vpop.xlane.xlu0 %230
    %v232 = vsel %vm216, %v228, 0.0
    %233 = vadd.xlane.f32.xlu0 %v232
    %v234 = vpop.xlane.xlu0 %233
    %v235 = vrcp.pop %v231
    %v236 = vrcp.pop %v234
    %v237 = vmul.f32 %v226, %v235
    %v238 = vmul.f32 %v228, %v236
    %239 = vst.msk [vmem:[#allocation8] sm:$0xff] %vm216, %v237
    %240 = vst.msk [vmem:[#allocation8 + $0x8] sm:$0xff] %vm216, %v238
    %v242 = vsel %vm216, %v237, 0
    %244 = vmatprep.subr.mxu0 0.0
    %245 = vmatpush1.msra.mxu0 %v55
    %246 = vmatprep.subr.mxu0 0.0
    %247 = vmatpush1.msra.mxu0 0.0
    %248 = vmatprep.subr.mxu0 0.0
    %249 = vmatpush1.msra.mxu0 0.0
    %250 = vmatprep.subr.mxu0 0.0
    %251 = vmatpush1.msra.mxu0 0.0
    %252 = vmatprep.subr.mxu0 0.0
    %253 = vmatpush1.msra.mxu0 0.0
    %254 = vmatprep.subr.mxu0 0.0
    %255 = vmatpush1.msra.mxu0 0.0
    %256 = vmatprep.subr.mxu0 0.0
    %257 = vmatpush1.msra.mxu0 0.0
    %258 = vmatprep.subr.mxu0 0.0
    %259 = vmatpush1.msra.mxu0 0.0
    %260 = vmatprep.subr.mxu0 0.0
    %261 = vmatpush1.msra.mxu0 0.0
    %262 = vmatprep.subr.mxu0 0.0
    %263 = vmatpush1.msra.mxu0 0.0
    %264 = vmatprep.subr.mxu0 0.0
    %265 = vmatpush1.msra.mxu0 0.0
    %266 = vmatprep.subr.mxu0 0.0
    %267 = vmatpush1.msra.mxu0 0.0
    %268 = vmatprep.subr.mxu0 0.0
    %269 = vmatpush1.msra.mxu0 0.0
    %270 = vmatprep.subr.mxu0 0.0
    %271 = vmatpush1.msra.mxu0 0.0
    %272 = vmatprep.subr.mxu0 0.0
    %273 = vmatpush1.msra.mxu0 0.0
    %274 = vmatprep.subr.mxu0 0.0
    %275 = vmatpush1.msra.mxu0 0.0
    %276 = vmatprep.subr.mxu0 0.0
    %277 = vmatpush1.msra.mxu0 0.0
    %278 = vmatprep.subr.mxu0 0.0
    %279 = vmatpush1.msra.mxu0 0.0
    %280 = vmatprep.subr.mxu0 0.0
    %281 = vmatpush1.msra.mxu0 0.0
    %282 = vmatprep.subr.mxu0 0.0
    %283 = vmatpush1.msra.mxu0 0.0
    %284 = vmatprep.subr.mxu0 0.0
    %285 = vmatpush1.msra.mxu0 0.0
    %286 = vmatprep.subr.mxu0 0.0
    %287 = vmatpush1.msra.mxu0 0.0
    %288 = vmatprep.subr.mxu0 0.0
    %289 = vmatpush1.msra.mxu0 0.0
    %290 = vmatprep.subr.mxu0 0.0
    %291 = vmatpush1.msra.mxu0 0.0
    %292 = vmatprep.subr.mxu0 0.0
    %293 = vmatpush1.msra.mxu0 0.0
    %294 = vmatprep.subr.mxu0 0.0
    %295 = vmatpush1.msra.mxu0 0.0
    %296 = vmatprep.subr.mxu0 0.0
    %297 = vmatpush1.msra.mxu0 0.0
    %298 = vmatprep.subr.mxu0 0.0
    %299 = vmatpush1.msra.mxu0 0.0
    %300 = vmatprep.subr.mxu0 0.0
    %301 = vmatpush1.msra.mxu0 0.0
    %302 = vmatprep.subr.mxu0 0.0
    %303 = vmatpush1.msra.mxu0 0.0
    %304 = vmatprep.subr.mxu0 0.0
    %305 = vmatpush1.msra.mxu0 0.0
    %306 = vmatprep.subr.mxu0 0.0
    %307 = vmatpush1.msra.mxu0 0.0
    %308 = vmatprep.mubr.f32.mxu0 0.0
    %309 = vmatmul.mubr.f32.gmra.mrb[0].mxu0 %v242
    %v310 = vpop.f32.mrb[0].mxu0
    %v311 = vadd.f32 0.0, %v310
    %v312 = vpop.f32.mrb[0].mxu0
    %313 = vdwg.mxu0
    %v315 = vsel %vm216, %v238, 0
    %317 = vmatprep.subr.mxu0 0.0
    %318 = vmatpush1.msra.mxu0 %v56
    %319 = vmatprep.subr.mxu0 0.0
    %320 = vmatpush1.msra.mxu0 0.0
    %321 = vmatprep.subr.mxu0 0.0
    %322 = vmatpush1.msra.mxu0 0.0
    %323 = vmatprep.subr.mxu0 0.0
    %324 = vmatpush1.msra.mxu0 0.0
    %325 = vmatprep.subr.mxu0 0.0
    %326 = vmatpush1.msra.mxu0 0.0
    %327 = vmatprep.subr.mxu0 0.0
    %328 = vmatpush1.msra.mxu0 0.0
    %329 = vmatprep.subr.mxu0 0.0
    %330 = vmatpush1.msra.mxu0 0.0
    %331 = vmatprep.subr.mxu0 0.0
    %332 = vmatpush1.msra.mxu0 0.0
    %333 = vmatprep.subr.mxu0 0.0
    %334 = vmatpush1.msra.mxu0 0.0
    %335 = vmatprep.subr.mxu0 0.0
    %336 = vmatpush1.msra.mxu0 0.0
    %337 = vmatprep.subr.mxu0 0.0
    %338 = vmatpush1.msra.mxu0 0.0
    %339 = vmatprep.subr.mxu0 0.0
    %340 = vmatpush1.msra.mxu0 0.0
    %341 = vmatprep.subr.mxu0 0.0
    %342 = vmatpush1.msra.mxu0 0.0
    %343 = vmatprep.subr.mxu0 0.0
    %344 = vmatpush1.msra.mxu0 0.0
    %345 = vmatprep.subr.mxu0 0.0
    %346 = vmatpush1.msra.mxu0 0.0
    %347 = vmatprep.subr.mxu0 0.0
    %348 = vmatpush1.msra.mxu0 0.0
    %349 = vmatprep.subr.mxu0 0.0
    %350 = vmatpush1.msra.mxu0 0.0
    %351 = vmatprep.subr.mxu0 0.0
    %352 = vmatpush1.msra.mxu0 0.0
    %353 = vmatprep.subr.mxu0 0.0
    %354 = vmatpush1.msra.mxu0 0.0
    %355 = vmatprep.subr.mxu0 0.0
    %356 = vmatpush1.msra.mxu0 0.0
    %357 = vmatprep.subr.mxu0 0.0
    %358 = vmatpush1.msra.mxu0 0.0
    %359 = vmatprep.subr.mxu0 0.0
    %360 = vmatpush1.msra.mxu0 0.0
    %361 = vmatprep.subr.mxu0 0.0
    %362 = vmatpush1.msra.mxu0 0.0
    %363 = vmatprep.subr.mxu0 0.0
    %364 = vmatpush1.msra.mxu0 0.0
    %365 = vmatprep.subr.mxu0 0.0
    %366 = vmatpush1.msra.mxu0 0.0
    %367 = vmatprep.subr.mxu0 0.0
    %368 = vmatpush1.msra.mxu0 0.0
    %369 = vmatprep.subr.mxu0 0.0
    %370 = vmatpush1.msra.mxu0 0.0
    %371 = vmatprep.subr.mxu0 0.0
    %372 = vmatpush1.msra.mxu0 0.0
    %373 = vmatprep.subr.mxu0 0.0
    %374 = vmatpush1.msra.mxu0 0.0
    %375 = vmatprep.subr.mxu0 0.0
    %376 = vmatpush1.msra.mxu0 0.0
    %377 = vmatprep.subr.mxu0 0.0
    %378 = vmatpush1.msra.mxu0 0.0
    %379 = vmatprep.subr.mxu0 0.0
    %380 = vmatpush1.msra.mxu0 0.0
    %381 = vmatprep.mubr.f32.mxu0 0.0
    %382 = vmatmul.mubr.f32.gmra.mrb[0].mxu0 %v315
    %v383 = vpop.f32.mrb[0].mxu0
    %v384 = vadd.f32 0.0, %v383
    %v385 = vpop.f32.mrb[0].mxu0
    %386 = vdwg.mxu0
    %387 = vst.msk [vmem:[#allocation7] sm:$0xff] %vm61, %v311
    %388 = vst.msk [vmem:[#allocation7 + $0x8] sm:$0xff] %vm61, %v384
    // Predicated region
    $region26: #{tpu_custom_call.1} parent=1 // pred_check
      _
    $region27: #{tpu_custom_call.1} parent=1 // pred_check_branch
      %390 = sbr.rel (0) target = $region29
    $region28: #{tpu_custom_call.1} parent=1 // pred_region
      %s392 = ssub.s32 256, 256
      %393 = vsyncadd [#allocation4], %s392
      %s394 = sshll.u32 [#allocation7], 4
      %s395 = int_to_ptr.vmem [resolvable:$true] %s394
      %400 = dma.vmem_to_hbm [thread:$0]  %s395, 256, %s4, [#allocation4], 128, 128, 8
    $region29: #{tpu_custom_call.1} parent=1 // pred_fallthru
      _
    // Predicated region
    $region30: #{tpu_custom_call.1} parent=1 // pred_check
      _
    $region31: #{tpu_custom_call.1} parent=1 // pred_check_branch
      %402 = sbr.rel (0) target = $region33
    $region32: #{tpu_custom_call.1} parent=1 // pred_region
      %s404 = ssub.s32 256, 256
      %405 = vsyncadd [#allocation9], %s404
      %s406 = sshll.u32 [#allocation8], 4
      %s407 = int_to_ptr.vmem [resolvable:$true] %s406
      %412 = dma.vmem_to_hbm [thread:$0]  %s407, 256, %s5, [#allocation9], 128, 128, 8
    $region33: #{tpu_custom_call.1} parent=1 // pred_fallthru
      _
    // Predicated region
    $region34: #{tpu_custom_call.1} parent=1 // pred_check
      _
    $region35: #{tpu_custom_call.1} parent=1 // pred_check_branch
      %414 = sbr.rel (0) target = $region37
    $region36: #{tpu_custom_call.1} parent=1 // pred_region
      %415 = dma.done [#allocation4], 256
    $region37: #{tpu_custom_call.1} parent=1 // pred_fallthru
      _
    // Predicated region
    $region38: #{tpu_custom_call.1} parent=1 // pred_check
      _
    $region39: #{tpu_custom_call.1} parent=1 // pred_check_branch
      %417 = sbr.rel (0) target = $region41
    $region40: #{tpu_custom_call.1} parent=1 // pred_region
      %418 = dma.done [#allocation9], 256
    $region41: #{tpu_custom_call.1} parent=1 // pred_fallthru
      _
    %419 = vsyncpa [#allocation3], 1
    %420 = vsyncpa [#allocation6], 1
    %421 = vsyncpa [#allocation4], 1
    %422 = vsyncpa [#allocation9], 1

</llo_original>
